<compile_context>
chip_gen: v6e
topology: v6e:2x2x1
jax: 0.10.0
libtpu: 0.0.40
codegen_flags: <defaults>
</compile_context>

<pallas_src>
import functools

import jax
import jax.numpy as jnp
from jax.experimental import pallas as pl
from jax.experimental.pallas import tpu as pltpu


# ----------------------------------------------------------------------------
# Kernels (single invocation, no grid; everything resident in VMEM)
# ----------------------------------------------------------------------------
def _simple_cat_tokens_kernel(tok_ref, mask_ref, wemb_ref, memb_ref, *rest,
                              vocab, batch, use_pos):
    # tok_ref:  (N, 1)  int32 token ids, N = B*L
    # mask_ref: (N, 1)  int32 in {0, 1}
    # wemb_ref: (V, D)  word embedding table
    # memb_ref: (2, MD) mask embedding table
    # [pos_ref: (L, D)  positional-encoding slice, only when use_pos]
    # out_ref:  (N, D + MD)
    if use_pos:
        pos_ref, out_ref = rest
    else:
        (out_ref,) = rest

    tok = tok_ref[...]                                             # (N, 1)
    n = tok.shape[0]

    # word_embed(sent): one-hot gather on the MXU (exact: one-hot rows are 0/1).
    vocab_ids = jax.lax.broadcasted_iota(jnp.int32, (n, vocab), 1)  # (N, V)
    onehot = (vocab_ids == tok).astype(wemb_ref.dtype)              # (N, V)
    word_vec = jnp.dot(onehot, wemb_ref[...],
                       precision=jax.lax.Precision.HIGHEST,
                       preferred_element_type=jnp.float32)          # (N, D)

    if use_pos:
        pos = pos_ref[...]                                          # (L, D)
        word_vec = word_vec + jnp.concatenate([pos] * batch, axis=0)

    # mask_embed(mask): 2-row lookup as a single vselect.
    w0 = memb_ref[0:1, :]                                           # (1, MD)
    w1 = memb_ref[1:2, :]                                           # (1, MD)
    mask_vec = jnp.where(mask_ref[...] != 0, w1, w0)                # (N, MD)

    # torch.cat([sent_vec, mask_vec], 2): build in registers, ONE full-tile store.
    out_ref[...] = jnp.concatenate(
        [word_vec.astype(out_ref.dtype), mask_vec.astype(out_ref.dtype)], axis=-1)


def _simple_cat_elmo_kernel(sent_ref, mask_ref, memb_ref, *rest, batch, use_pos):
    # sent_ref: (N, D)  pre-embedded sentence vectors (is_elmo=True path)
    if use_pos:
        pos_ref, out_ref = rest
    else:
        (out_ref,) = rest

    word_vec = sent_ref[...].astype(jnp.float32)                    # (N, D)
    if use_pos:
        word_vec = word_vec + jnp.concatenate([pos_ref[...]] * batch, axis=0)

    w0 = memb_ref[0:1, :]
    w1 = memb_ref[1:2, :]
    mask_vec = jnp.where(mask_ref[...] != 0, w1, w0)                # (N, MD)

    out_ref[...] = jnp.concatenate(
        [word_vec.astype(out_ref.dtype), mask_vec.astype(out_ref.dtype)], axis=-1)


# ----------------------------------------------------------------------------
# Wrapper
# ----------------------------------------------------------------------------
def simple_cat_forward(sent, mask, word_embed_w, mask_embed_w, pos_enc_w=None,
                       *, is_elmo=False, is_pos=False):
    """Pallas implementation of SimpleCat.forward (dropout = identity / eval)."""
    if is_elmo:
        B, L, D = sent.shape
        sent2d = sent.reshape(B * L, D).astype(jnp.float32)
    else:
        B, L = sent.shape
        D = word_embed_w.shape[1]
        sent2d = sent.astype(jnp.int32).reshape(B * L, 1)
    MD = mask_embed_w.shape[1]
    N = B * L
    mask2d = mask.astype(jnp.int32).reshape(N, 1)

    args = [sent2d, mask2d]
    if not is_elmo:
        args.append(word_embed_w.astype(jnp.float32))
    args.append(mask_embed_w.astype(jnp.float32))
    if is_pos:
        if pos_enc_w is None:
            raise ValueError("is_pos=True requires pos_enc_w")
        args.append(pos_enc_w[:L].astype(jnp.float32))              # static slice of table

    if is_elmo:
        kernel = functools.partial(_simple_cat_elmo_kernel, batch=B, use_pos=is_pos)
    else:
        kernel = functools.partial(_simple_cat_tokens_kernel,
                                   vocab=word_embed_w.shape[0], batch=B,
                                   use_pos=is_pos)

    vmem_spec = pl.BlockSpec(memory_space=pltpu.MemorySpace.VMEM)
    out2d = pl.pallas_call(
        kernel,
        out_shape=jax.ShapeDtypeStruct((N, D + MD), jnp.float32),
        in_specs=[vmem_spec] * len(args),
        out_specs=vmem_spec,
    )(*args)
    return out2d.reshape(B, L, D + MD)


# ----------------------------------------------------------------------------
# Parameter init (sinusoid position table, as in the module) and JAX references
# ----------------------------------------------------------------------------
def position_encoding_init(n_position, emb_dim):
    pos = jnp.arange(n_position, dtype=jnp.float32)[:, None]        # (P, 1)
    j = jnp.arange(emb_dim, dtype=jnp.float32)[None, :]             # (1, D)
    angle = pos / jnp.power(10000.0, 2.0 * jnp.floor(j / 2.0) / emb_dim)
    even = (jnp.arange(emb_dim) % 2 == 0)[None, :]
    table = jnp.where(even, jnp.sin(angle), jnp.cos(angle))
    return table.at[0].set(0.0)                                      # padding_idx=0


def _ref_forward(sent, mask, word_w, mask_w, pos_w=None, *, is_elmo=False, is_pos=False):
    if is_elmo:
        sv = sent.astype(jnp.float32)
    else:
        sv = word_w[sent.astype(jnp.int32)]
    if is_pos:
        L = sv.shape[1]
        sv = sv + pos_w[:L][None, :, :]
    mv = mask_w[mask.astype(jnp.int32)]
    return jnp.concatenate([sv, mv], axis=2)


if __name__ == "__main__":
    # config: embed_num=100, embed_dim=32, mask_dim=16; batch=2, max_len=8
    B, L, V, D, MD = 2, 8, 100, 32, 16

    key = jax.random.PRNGKey(0)
    k_tok, k_mask, k_wemb, k_memb, k_elmo = jax.random.split(key, 5)

    tokens = jax.random.randint(k_tok, (B, L), 0, V, dtype=jnp.int32)
    mask = (jax.random.uniform(k_mask, (B, L)) > 0.5).astype(jnp.int32)
    word_embed_w = jax.random.normal(k_wemb, (V, D), dtype=jnp.float32)
    mask_embed_w = jax.random.normal(k_memb, (2, MD), dtype=jnp.float32)
    pos_enc_w = position_encoding_init(100, D)
    sent_elmo = jax.random.normal(k_elmo, (B, L, D), dtype=jnp.float32)

    # Default path: is_elmo=False, is_pos=False
    out = jax.block_until_ready(
        simple_cat_forward(tokens, mask, word_embed_w, mask_embed_w))
    ref = _ref_forward(tokens, mask, word_embed_w, mask_embed_w)
    assert out.shape == (B, L, D + MD)
    assert jnp.allclose(out, ref, atol=1e-5, rtol=1e-5)

    # is_pos=True path
    out_pos = jax.block_until_ready(simple_cat_forward(
        tokens, mask, word_embed_w, mask_embed_w, pos_enc_w, is_pos=True))
    ref_pos = _ref_forward(tokens, mask, word_embed_w, mask_embed_w, pos_enc_w,
                           is_pos=True)
    assert jnp.allclose(out_pos, ref_pos, atol=1e-5, rtol=1e-5)

    # is_elmo=True path (sent already embedded)
    out_elmo = jax.block_until_ready(simple_cat_forward(
        sent_elmo, mask, word_embed_w, mask_embed_w, is_elmo=True))
    ref_elmo = _ref_forward(sent_elmo, mask, word_embed_w, mask_embed_w, is_elmo=True)
    assert jnp.allclose(out_elmo, ref_elmo, atol=1e-5, rtol=1e-5)

    print("KERNEL_OK")
</pallas_src>

<mosaic_0001>
module attributes {stable_mosaic.version = 11 : i64} {
  func.func @_simple_cat_tokens_kernel(%arg0: memref<16x1xi32, #tpu.memory_space<vmem>>, %arg1: memref<16x1xi32, #tpu.memory_space<vmem>>, %arg2: memref<100x32xf32, #tpu.memory_space<vmem>>, %arg3: memref<2x16xf32, #tpu.memory_space<vmem>>, %arg4: memref<16x48xf32, #tpu.memory_space<vmem>>) attributes {dimension_semantics = [], scalar_prefetch = 0 : i64, scratch_operands = 0 : i64, tpu.core_type = #tpu.core_type<tc>} {
    %c0 = arith.constant 0 : index
    %c0_0 = arith.constant 0 : index
    %0 = vector.load %arg0[%c0, %c0_0] : memref<16x1xi32, #tpu.memory_space<vmem>>, vector<16x1xi32>
    %1 = tpu.iota {dimensions = array<i32: 1>} : vector<16x100xi32>
    %2 = vector.broadcast %0 : vector<16x1xi32> to vector<16x100xi32>
    %3 = arith.cmpi eq, %1, %2 : vector<16x100xi32>
    %4 = arith.extui %3 : vector<16x100xi1> to vector<16x100xi32>
    %5 = arith.sitofp %4 : vector<16x100xi32> to vector<16x100xf32>
    %c0_1 = arith.constant 0 : index
    %c0_2 = arith.constant 0 : index
    %6 = vector.load %arg2[%c0_1, %c0_2] : memref<100x32xf32, #tpu.memory_space<vmem>>, vector<100x32xf32>
    %cst = arith.constant dense<0.000000e+00> : vector<16x32xf32>
    %7 = tpu.matmul %5, %6, %cst {dimension_numbers = #tpu.dot_dimension_numbers<[1], [0], [0], [1], [0, 0, 1, 1], [], []>, precision = #tpu.contract_precision<fp32>} : vector<16x100xf32>, vector<100x32xf32>, vector<16x32xf32> -> vector<16x32xf32>
    %c0_3 = arith.constant 0 : index
    %c0_4 = arith.constant 0 : index
    %8 = vector.load %arg3[%c0_3, %c0_4] : memref<2x16xf32, #tpu.memory_space<vmem>>, vector<1x16xf32>
    %c1 = arith.constant 1 : index
    %c0_5 = arith.constant 0 : index
    %9 = vector.load %arg3[%c1, %c0_5] : memref<2x16xf32, #tpu.memory_space<vmem>>, vector<1x16xf32>
    %c0_6 = arith.constant 0 : index
    %c0_7 = arith.constant 0 : index
    %10 = vector.load %arg1[%c0_6, %c0_7] : memref<16x1xi32, #tpu.memory_space<vmem>>, vector<16x1xi32>
    %c0_i32 = arith.constant 0 : i32
    %11 = vector.broadcast %c0_i32 : i32 to vector<16x1xi32>
    %12 = arith.cmpi ne, %10, %11 : vector<16x1xi32>
    %13 = vector.shape_cast %12 : vector<16x1xi1> to vector<16x1xi1>
    %14 = vector.broadcast %13 : vector<16x1xi1> to vector<16x16xi1>
    %15 = vector.shape_cast %9 : vector<1x16xf32> to vector<1x16xf32>
    %16 = vector.broadcast %15 : vector<1x16xf32> to vector<16x16xf32>
    %17 = vector.shape_cast %8 : vector<1x16xf32> to vector<1x16xf32>
    %18 = vector.broadcast %17 : vector<1x16xf32> to vector<16x16xf32>
    %19 = arith.select %14, %16, %18 : vector<16x16xi1>, vector<16x16xf32>
    %20 = tpu.concatenate %7, %19 in 1 : vector<16x32xf32>, vector<16x16xf32> -> vector<16x48xf32>
    %c0_8 = arith.constant 0 : index
    %c0_9 = arith.constant 0 : index
    %21 = vector.load %arg4[%c0_8, %c0_9] : memref<16x48xf32, #tpu.memory_space<vmem>>, vector<16x48xf32>
    tpu.vector_store %arg4[%c0_8, %c0_9], %20 {strides = array<i32>} : memref<16x48xf32, #tpu.memory_space<vmem>>, vector<16x48xf32>,
    return
  }
}

</mosaic_0001>

<llo_original>
// kernel: tpu_custom_call.1
$region0: #{tpu_custom_call.1}
  #allocation0 [shape = 'u32[]', space=smem, size = 0x4, offset = 0x4, fixed_abs, tag = 'smem constant byte address 0x4 - core index']
  #allocation1 [shape = 'u32[144,128]{1,0:T(1,128)}', space=vmem, size = 0x12000, scoped, tag = 'internal scratch']
  %s0 = inlined_call_operand.vmem [shape: s32[16,1], index: 0, kind: input, shape index: {}]
  %s1 = inlined_call_operand.vmem [shape: s32[16,1], index: 1, kind: input, shape index: {}]
  %s2 = inlined_call_operand.vmem [shape: f32[100,32], index: 2, kind: input, shape index: {}]
  %s3 = inlined_call_operand.vmem [shape: f32[2,16], index: 3, kind: input, shape index: {}]
  %s4 = inlined_call_operand.hbm [shape: f32[16,48], index: 4, kind: output, shape index: {}]
  %s5 = sld [smem:[#allocation0]]
  $region26: #{tpu_custom_call.1} parent=0
    _
  %s7 = ssub.s32 1, %s5
  %s8 = scalar_select 0, %s7, %s5
  $region1: #{tpu_custom_call.1} parent=0
    #allocation2 [shape = 'u8[8192]{0}', space=vmem, size = 0x2000, scoped, tag = 'output window, operand 0, single buffered']
    #allocation3 [shape = 's32[1]{0}', space=sflag, size = 0x4, scoped, tag = 'scoped memory for tpu_custom_call.1']
    %9 = vsyncpa [#allocation3], 0
    // Predicated region
    $region2: #{tpu_custom_call.1} parent=1 // pred_check
      _
    $region3: #{tpu_custom_call.1} parent=1 // pred_check_branch
      %11 = sbr.rel (0) target = $region5
    $region4: #{tpu_custom_call.1} parent=1 // pred_region
      _
    $region5: #{tpu_custom_call.1} parent=1 // pred_fallthru
      _
    // Predicated region
    $region6: #{tpu_custom_call.1} parent=1 // pred_check
      _
    $region7: #{tpu_custom_call.1} parent=1 // pred_check_branch
      %13 = sbr.rel (0) target = $region9
    $region8: #{tpu_custom_call.1} parent=1 // pred_region
      _
    $region9: #{tpu_custom_call.1} parent=1 // pred_fallthru
      _
    // Predicated region
    $region10: #{tpu_custom_call.1} parent=1 // pred_check
      _
    $region11: #{tpu_custom_call.1} parent=1 // pred_check_branch
      %15 = sbr.rel (0) target = $region13
    $region12: #{tpu_custom_call.1} parent=1 // pred_region
      _
    $region13: #{tpu_custom_call.1} parent=1 // pred_fallthru
      _
    // Predicated region
    $region14: #{tpu_custom_call.1} parent=1 // pred_check
      _
    $region15: #{tpu_custom_call.1} parent=1 // pred_check_branch
      %17 = sbr.rel (0) target = $region17
    $region16: #{tpu_custom_call.1} parent=1 // pred_region
      _
    $region17: #{tpu_custom_call.1} parent=1 // pred_fallthru
      _
    %v18 = vld [vmem:[%s0] sm:$0xff]
    %v19 = vld [vmem:[%s0 + $0x8] sm:$0xff]
    %v20 = vlaneseq
    %v21 = vand.u32 %v20, 127
    %22 = vset.pattern.permute.xlu0 0
    %23 = vperm.xlu0 %22, %v18
    %v24 = vpop.permute.xlu0 %23
    %25 = vset.pattern.permute.xlu0 0
    %26 = vperm.xlu0 %25, %v19
    %v27 = vpop.permute.xlu0 %26
    %vm28 = vcmp.eq.s32.totalorder %v21, %v24
    %vm29 = vcmp.eq.s32.totalorder %v21, %v27
    %v30 = vsel %vm28, 1, 0
    %v31 = vsel %vm29, 1, 0
    %v32 = vcvt.s32.f32 %v30
    %v33 = vcvt.s32.f32 %v31
    %v34 = vld [vmem:[%s2] sm:$0xff]
    %v35 = vld [vmem:[%s2 + $0x8] sm:$0xff]
    %v36 = vld [vmem:[%s2 + $0x10] sm:$0xff]
    %v37 = vld [vmem:[%s2 + $0x18] sm:$0xff]
    %v38 = vld [vmem:[%s2 + $0x20] sm:$0xff]
    %v39 = vld [vmem:[%s2 + $0x28] sm:$0xff]
    %v40 = vld [vmem:[%s2 + $0x30] sm:$0xff]
    %v41 = vld [vmem:[%s2 + $0x38] sm:$0xff]
    %v42 = vld [vmem:[%s2 + $0x40] sm:$0xff]
    %v43 = vld [vmem:[%s2 + $0x48] sm:$0xff]
    %v44 = vld [vmem:[%s2 + $0x50] sm:$0xff]
    %v45 = vld [vmem:[%s2 + $0x58] sm:$0xff]
    %v46 = vld [vmem:[%s2 + $0x60] sm:$0xf]
    %vm47 = vcmask 818176
    %v49 = vsel %vm47, %v32, 0
    %v52 = vsel %vm47, %v33, 0
    %vm54 = vcmask 1043456
    %v56 = vsel %vm54, %v46, 0
    %58 = vmatprep.subr.mxu0 0.0
    %59 = vmatpush1.msra.mxu0 0.0
    %60 = vmatprep.subr.mxu0 0.0
    %61 = vmatpush1.msra.mxu0 0.0
    %62 = vmatprep.subr.mxu0 0.0
    %63 = vmatpush1.msra.mxu0 0.0
    %64 = vmatprep.subr.mxu0 0.0
    %v65 = vand.u32 %v56, 4294901760
    %66 = vmatpush1.msra.mxu0 %v65
    %67 = vmatprep.subr.mxu0 0.0
    %v68 = vand.u32 %v45, 4294901760
    %69 = vmatpush1.msra.mxu0 %v68
    %70 = vmatprep.subr.mxu0 0.0
    %v71 = vand.u32 %v44, 4294901760
    %72 = vmatpush1.msra.mxu0 %v71
    %73 = vmatprep.subr.mxu0 0.0
    %v74 = vand.u32 %v43, 4294901760
    %75 = vmatpush1.msra.mxu0 %v74
    %76 = vmatprep.subr.mxu0 0.0
    %v77 = vand.u32 %v42, 4294901760
    %78 = vmatpush1.msra.mxu0 %v77
    %79 = vmatprep.subr.mxu0 0.0
    %v80 = vand.u32 %v41, 4294901760
    %81 = vmatpush1.msra.mxu0 %v80
    %82 = vmatprep.subr.mxu0 0.0
    %v83 = vand.u32 %v40, 4294901760
    %84 = vmatpush1.msra.mxu0 %v83
    %85 = vmatprep.subr.mxu0 0.0
    %v86 = vand.u32 %v39, 4294901760
    %87 = vmatpush1.msra.mxu0 %v86
    %88 = vmatprep.subr.mxu0 0.0
    %v89 = vand.u32 %v38, 4294901760
    %90 = vmatpush1.msra.mxu0 %v89
    %91 = vmatprep.subr.mxu0 0.0
    %v92 = vand.u32 %v37, 4294901760
    %93 = vmatpush1.msra.mxu0 %v92
    %94 = vmatprep.subr.mxu0 0.0
    %v95 = vand.u32 %v36, 4294901760
    %96 = vmatpush1.msra.mxu0 %v95
    %97 = vmatprep.subr.mxu0 0.0
    %v98 = vand.u32 %v35, 4294901760
    %99 = vmatpush1.msra.mxu0 %v98
    %100 = vmatprep.subr.mxu0 0.0
    %v101 = vand.u32 %v34, 4294901760
    %102 = vmatpush1.msra.mxu0 %v101
    %103 = vmatprep.subr.mxu0 0.0
    %104 = vmatpush2.msra.mxu0 0.0
    %105 = vmatprep.subr.mxu0 0.0
    %106 = vmatpush2.msra.mxu0 0.0
    %107 = vmatprep.subr.mxu0 0.0
    %108 = vmatpush2.msra.mxu0 0.0
    %109 = vmatprep.subr.mxu0 0.0
    %110 = vmatpush2.msra.mxu0 0.0
    %111 = vmatprep.subr.mxu0 0.0
    %112 = vmatpush2.msra.mxu0 0.0
    %113 = vmatprep.subr.mxu0 0.0
    %114 = vmatpush2.msra.mxu0 0.0
    %115 = vmatprep.subr.mxu0 0.0
    %116 = vmatpush2.msra.mxu0 0.0
    %117 = vmatprep.subr.mxu0 0.0
    %118 = vmatpush2.msra.mxu0 0.0
    %119 = vmatprep.subr.mxu0 0.0
    %120 = vmatpush2.msra.mxu0 0.0
    %121 = vmatprep.subr.mxu0 0.0
    %122 = vmatpush2.msra.mxu0 0.0
    %123 = vmatprep.subr.mxu0 0.0
    %124 = vmatpush2.msra.mxu0 0.0
    %125 = vmatprep.subr.mxu0 0.0
    %126 = vmatpush2.msra.mxu0 0.0
    %127 = vmatprep.subr.mxu0 0.0
    %128 = vmatpush2.msra.mxu0 0.0
    %129 = vmatprep.subr.mxu0 0.0
    %130 = vmatpush2.msra.mxu0 0.0
    %131 = vmatprep.subr.mxu0 0.0
    %132 = vmatpush2.msra.mxu0 0.0
    %133 = vmatprep.subr.mxu0 0.0
    %134 = vmatpush2.msra.mxu0 0.0
    %135 = vmatprep.mubr.f32.mxu0 0.0
    %v136 = vand.u32 %v49, 4294901760
    %v137 = vsub.f32 %v49, %v136
    %v138 = vand.u32 %v137, 4294901760
    %v139 = vsub.f32 %v137, %v138
    %v140 = vand.u32 %v139, 4294901760
    %141 = vmatmul.mubr.f32.gmra.mxu0 %v140
    %v142 = vpop.f32.mrf.mxu0
    %v143 = vadd.f32 0.0, %v142
    %v144 = vpop.f32.mrf.mxu0
    %145 = vmatprep.mubr.f32.mxu0 0.0
    %v146 = vand.u32 %v52, 4294901760
    %v147 = vsub.f32 %v52, %v146
    %v148 = vand.u32 %v147, 4294901760
    %v149 = vsub.f32 %v147, %v148
    %v150 = vand.u32 %v149, 4294901760
    %151 = vmatmul.mubr.f32.gmra.mxu0 %v150
    %v152 = vpop.f32.mrf.mxu0
    %v153 = vadd.f32 0.0, %v152
    %v154 = vpop.f32.mrf.mxu0
    %155 = vdwg.mxu0
    %156 = vmatprep.subr.mxu0 0.0
    %157 = vmatpush1.msra.mxu0 0.0
    %158 = vmatprep.subr.mxu0 0.0
    %159 = vmatpush1.msra.mxu0 0.0
    %160 = vmatprep.subr.mxu0 0.0
    %161 = vmatpush1.msra.mxu0 0.0
    %162 = vmatprep.subr.mxu0 0.0
    %v163 = vand.u32 %v56, 4294901760
    %v164 = vsub.f32 %v56, %v163
    %v165 = vand.u32 %v164, 4294901760
    %v166 = vsub.f32 %v164, %v165
    %v167 = vand.u32 %v166, 4294901760
    %168 = vmatpush1.msra.mxu0 %v167
    %169 = vmatprep.subr.mxu0 0.0
    %v170 = vand.u32 %v45, 4294901760
    %v171 = vsub.f32 %v45, %v170
    %v172 = vand.u32 %v171, 4294901760
    %v173 = vsub.f32 %v171, %v172
    %v174 = vand.u32 %v173, 4294901760
    %175 = vmatpush1.msra.mxu0 %v174
    %176 = vmatprep.subr.mxu0 0.0
    %v177 = vand.u32 %v44, 4294901760
    %v178 = vsub.f32 %v44, %v177
    %v179 = vand.u32 %v178, 4294901760
    %v180 = vsub.f32 %v178, %v179
    %v181 = vand.u32 %v180, 4294901760
    %182 = vmatpush1.msra.mxu0 %v181
    %183 = vmatprep.subr.mxu0 0.0
    %v184 = vand.u32 %v43, 4294901760
    %v185 = vsub.f32 %v43, %v184
    %v186 = vand.u32 %v185, 4294901760
    %v187 = vsub.f32 %v185, %v186
    %v188 = vand.u32 %v187, 4294901760
    %189 = vmatpush1.msra.mxu0 %v188
    %190 = vmatprep.subr.mxu0 0.0
    %v191 = vand.u32 %v42, 4294901760
    %v192 = vsub.f32 %v42, %v191
    %v193 = vand.u32 %v192, 4294901760
    %v194 = vsub.f32 %v192, %v193
    %v195 = vand.u32 %v194, 4294901760
    %196 = vmatpush1.msra.mxu0 %v195
    %197 = vmatprep.subr.mxu0 0.0
    %v198 = vand.u32 %v41, 4294901760
    %v199 = vsub.f32 %v41, %v198
    %v200 = vand.u32 %v199, 4294901760
    %v201 = vsub.f32 %v199, %v200
    %v202 = vand.u32 %v201, 4294901760
    %203 = vmatpush1.msra.mxu0 %v202
    %204 = vmatprep.subr.mxu0 0.0
    %v205 = vand.u32 %v40, 4294901760
    %v206 = vsub.f32 %v40, %v205
    %v207 = vand.u32 %v206, 4294901760
    %v208 = vsub.f32 %v206, %v207
    %v209 = vand.u32 %v208, 4294901760
    %210 = vmatpush1.msra.mxu0 %v209
    %211 = vmatprep.subr.mxu0 0.0
    %v212 = vand.u32 %v39, 4294901760
    %v213 = vsub.f32 %v39, %v212
    %v214 = vand.u32 %v213, 4294901760
    %v215 = vsub.f32 %v213, %v214
    %v216 = vand.u32 %v215, 4294901760
    %217 = vmatpush1.msra.mxu0 %v216
    %218 = vmatprep.subr.mxu0 0.0
    %v219 = vand.u32 %v38, 4294901760
    %v220 = vsub.f32 %v38, %v219
    %v221 = vand.u32 %v220, 4294901760
    %v222 = vsub.f32 %v220, %v221
    %v223 = vand.u32 %v222, 4294901760
    %224 = vmatpush1.msra.mxu0 %v223
    %225 = vmatprep.subr.mxu0 0.0
    %v226 = vand.u32 %v37, 4294901760
    %v227 = vsub.f32 %v37, %v226
    %v228 = vand.u32 %v227, 4294901760
    %v229 = vsub.f32 %v227, %v228
    %v230 = vand.u32 %v229, 4294901760
    %231 = vmatpush1.msra.mxu0 %v230
    %232 = vmatprep.subr.mxu0 0.0
    %v233 = vand.u32 %v36, 4294901760
    %v234 = vsub.f32 %v36, %v233
    %v235 = vand.u32 %v234, 4294901760
    %v236 = vsub.f32 %v234, %v235
    %v237 = vand.u32 %v236, 4294901760
    %238 = vmatpush1.msra.mxu0 %v237
    %239 = vmatprep.subr.mxu0 0.0
    %v240 = vand.u32 %v35, 4294901760
    %v241 = vsub.f32 %v35, %v240
    %v242 = vand.u32 %v241, 4294901760
    %v243 = vsub.f32 %v241, %v242
    %v244 = vand.u32 %v243, 4294901760
    %245 = vmatpush1.msra.mxu0 %v244
    %246 = vmatprep.subr.mxu0 0.0
    %v247 = vand.u32 %v34, 4294901760
    %v248 = vsub.f32 %v34, %v247
    %v249 = vand.u32 %v248, 4294901760
    %v250 = vsub.f32 %v248, %v249
    %v251 = vand.u32 %v250, 4294901760
    %252 = vmatpush1.msra.mxu0 %v251
    %253 = vmatprep.subr.mxu0 0.0
    %254 = vmatpush2.msra.mxu0 0.0
    %255 = vmatprep.subr.mxu0 0.0
    %256 = vmatpush2.msra.mxu0 0.0
    %257 = vmatprep.subr.mxu0 0.0
    %258 = vmatpush2.msra.mxu0 0.0
    %259 = vmatprep.subr.mxu0 0.0
    %260 = vmatpush2.msra.mxu0 0.0
    %261 = vmatprep.subr.mxu0 0.0
    %262 = vmatpush2.msra.mxu0 0.0
    %263 = vmatprep.subr.mxu0 0.0
    %264 = vmatpush2.msra.mxu0 0.0
    %265 = vmatprep.subr.mxu0 0.0
    %266 = vmatpush2.msra.mxu0 0.0
    %267 = vmatprep.subr.mxu0 0.0
    %268 = vmatpush2.msra.mxu0 0.0
    %269 = vmatprep.subr.mxu0 0.0
    %270 = vmatpush2.msra.mxu0 0.0
    %271 = vmatprep.subr.mxu0 0.0
    %272 = vmatpush2.msra.mxu0 0.0
    %273 = vmatprep.subr.mxu0 0.0
    %274 = vmatpush2.msra.mxu0 0.0
    %275 = vmatprep.subr.mxu0 0.0
    %276 = vmatpush2.msra.mxu0 0.0
    %277 = vmatprep.subr.mxu0 0.0
    %278 = vmatpush2.msra.mxu0 0.0
    %279 = vmatprep.subr.mxu0 0.0
    %280 = vmatpush2.msra.mxu0 0.0
    %281 = vmatprep.subr.mxu0 0.0
    %282 = vmatpush2.msra.mxu0 0.0
    %283 = vmatprep.subr.mxu0 0.0
    %284 = vmatpush2.msra.mxu0 0.0
    %285 = vmatprep.mubr.f32.mxu0 0.0
    %v286 = vand.u32 %v49, 4294901760
    %287 = vmatmul.mubr.f32.gmra.mxu0 %v286
    %v288 = vpop.f32.mrf.mxu0
    %v289 = vadd.f32 %v143, %v288
    %v290 = vpop.f32.mrf.mxu0
    %291 = vmatprep.mubr.f32.mxu0 0.0
    %v292 = vand.u32 %v52, 4294901760
    %293 = vmatmul.mubr.f32.gmra.mxu0 %v292
    %v294 = vpop.f32.mrf.mxu0
    %v295 = vadd.f32 %v153, %v294
    %v296 = vpop.f32.mrf.mxu0
    %297 = vdwg.mxu0
    %298 = vmatprep.subr.mxu0 0.0
    %299 = vmatpush1.msra.mxu0 0.0
    %300 = vmatprep.subr.mxu0 0.0
    %301 = vmatpush1.msra.mxu0 0.0
    %302 = vmatprep.subr.mxu0 0.0
    %303 = vmatpush1.msra.mxu0 0.0
    %304 = vmatprep.subr.mxu0 0.0
    %v305 = vand.u32 %v56, 4294901760
    %v306 = vsub.f32 %v56, %v305
    %307 = vmatpush1.msra.mxu0 %v306
    %308 = vmatprep.subr.mxu0 0.0
    %v309 = vand.u32 %v45, 4294901760
    %v310 = vsub.f32 %v45, %v309
    %311 = vmatpush1.msra.mxu0 %v310
    %312 = vmatprep.subr.mxu0 0.0
    %v313 = vand.u32 %v44, 4294901760
    %v314 = vsub.f32 %v44, %v313
    %315 = vmatpush1.msra.mxu0 %v314
    %316 = vmatprep.subr.mxu0 0.0
    %v317 = vand.u32 %v43, 4294901760
    %v318 = vsub.f32 %v43, %v317
    %319 = vmatpush1.msra.mxu0 %v318
    %320 = vmatprep.subr.mxu0 0.0
    %v321 = vand.u32 %v42, 4294901760
    %v322 = vsub.f32 %v42, %v321
    %323 = vmatpush1.msra.mxu0 %v322
    %324 = vmatprep.subr.mxu0 0.0
    %v325 = vand.u32 %v41, 4294901760
    %v326 = vsub.f32 %v41, %v325
    %327 = vmatpush1.msra.mxu0 %v326
    %328 = vmatprep.subr.mxu0 0.0
    %v329 = vand.u32 %v40, 4294901760
    %v330 = vsub.f32 %v40, %v329
    %331 = vmatpush1.msra.mxu0 %v330
    %332 = vmatprep.subr.mxu0 0.0
    %v333 = vand.u32 %v39, 4294901760
    %v334 = vsub.f32 %v39, %v333
    %335 = vmatpush1.msra.mxu0 %v334
    %336 = vmatprep.subr.mxu0 0.0
    %v337 = vand.u32 %v38, 4294901760
    %v338 = vsub.f32 %v38, %v337
    %339 = vmatpush1.msra.mxu0 %v338
    %340 = vmatprep.subr.mxu0 0.0
    %v341 = vand.u32 %v37, 4294901760
    %v342 = vsub.f32 %v37, %v341
    %343 = vmatpush1.msra.mxu0 %v342
    %344 = vmatprep.subr.mxu0 0.0
    %v345 = vand.u32 %v36, 4294901760
    %v346 = vsub.f32 %v36, %v345
    %347 = vmatpush1.msra.mxu0 %v346
    %348 = vmatprep.subr.mxu0 0.0
    %v349 = vand.u32 %v35, 4294901760
    %v350 = vsub.f32 %v35, %v349
    %351 = vmatpush1.msra.mxu0 %v350
    %352 = vmatprep.subr.mxu0 0.0
    %v353 = vand.u32 %v34, 4294901760
    %v354 = vsub.f32 %v34, %v353
    %355 = vmatpush1.msra.mxu0 %v354
    %356 = vmatprep.subr.mxu0 0.0
    %357 = vmatpush2.msra.mxu0 0.0
    %358 = vmatprep.subr.mxu0 0.0
    %359 = vmatpush2.msra.mxu0 0.0
    %360 = vmatprep.subr.mxu0 0.0
    %361 = vmatpush2.msra.mxu0 0.0
    %362 = vmatprep.subr.mxu0 0.0
    %363 = vmatpush2.msra.mxu0 0.0
    %364 = vmatprep.subr.mxu0 0.0
    %365 = vmatpush2.msra.mxu0 0.0
    %366 = vmatprep.subr.mxu0 0.0
    %367 = vmatpush2.msra.mxu0 0.0
    %368 = vmatprep.subr.mxu0 0.0
    %369 = vmatpush2.msra.mxu0 0.0
    %370 = vmatprep.subr.mxu0 0.0
    %371 = vmatpush2.msra.mxu0 0.0
    %372 = vmatprep.subr.mxu0 0.0
    %373 = vmatpush2.msra.mxu0 0.0
    %374 = vmatprep.subr.mxu0 0.0
    %375 = vmatpush2.msra.mxu0 0.0
    %376 = vmatprep.subr.mxu0 0.0
    %377 = vmatpush2.msra.mxu0 0.0
    %378 = vmatprep.subr.mxu0 0.0
    %379 = vmatpush2.msra.mxu0 0.0
    %380 = vmatprep.subr.mxu0 0.0
    %381 = vmatpush2.msra.mxu0 0.0
    %382 = vmatprep.subr.mxu0 0.0
    %383 = vmatpush2.msra.mxu0 0.0
    %384 = vmatprep.subr.mxu0 0.0
    %385 = vmatpush2.msra.mxu0 0.0
    %386 = vmatprep.subr.mxu0 0.0
    %387 = vmatpush2.msra.mxu0 0.0
    %388 = vmatprep.mubr.f32.mxu0 0.0
    %v389 = vand.u32 %v49, 4294901760
    %v390 = vsub.f32 %v49, %v389
    %391 = vmatmul.mubr.f32.gmra.mxu0 %v390
    %v392 = vpop.f32.mrf.mxu0
    %v393 = vadd.f32 %v289, %v392
    %v394 = vpop.f32.mrf.mxu0
    %395 = vmatprep.mubr.f32.mxu0 0.0
    %v396 = vand.u32 %v52, 4294901760
    %v397 = vsub.f32 %v52, %v396
    %398 = vmatmul.mubr.f32.gmra.mxu0 %v397
    %v399 = vpop.f32.mrf.mxu0
    %v400 = vadd.f32 %v295, %v399
    %v401 = vpop.f32.mrf.mxu0
    %402 = vdwg.mxu0
    %403 = vmatprep.subr.mxu0 0.0
    %404 = vmatpush1.msra.mxu0 0.0
    %405 = vmatprep.subr.mxu0 0.0
    %406 = vmatpush1.msra.mxu0 0.0
    %407 = vmatprep.subr.mxu0 0.0
    %408 = vmatpush1.msra.mxu0 0.0
    %409 = vmatprep.subr.mxu0 0.0
    %v410 = vand.u32 %v56, 4294901760
    %411 = vmatpush1.msra.mxu0 %v410
    %412 = vmatprep.subr.mxu0 0.0
    %v413 = vand.u32 %v45, 4294901760
    %414 = vmatpush1.msra.mxu0 %v413
    %415 = vmatprep.subr.mxu0 0.0
    %v416 = vand.u32 %v44, 4294901760
    %417 = vmatpush1.msra.mxu0 %v416
    %418 = vmatprep.subr.mxu0 0.0
    %v419 = vand.u32 %v43, 4294901760
    %420 = vmatpush1.msra.mxu0 %v419
    %421 = vmatprep.subr.mxu0 0.0
    %v422 = vand.u32 %v42, 4294901760
    %423 = vmatpush1.msra.mxu0 %v422
    %424 = vmatprep.subr.mxu0 0.0
    %v425 = vand.u32 %v41, 4294901760
    %426 = vmatpush1.msra.mxu0 %v425
    %427 = vmatprep.subr.mxu0 0.0
    %v428 = vand.u32 %v40, 4294901760
    %429 = vmatpush1.msra.mxu0 %v428
    %430 = vmatprep.subr.mxu0 0.0
    %v431 = vand.u32 %v39, 4294901760
    %432 = vmatpush1.msra.mxu0 %v431
    %433 = vmatprep.subr.mxu0 0.0
    %v434 = vand.u32 %v38, 4294901760
    %435 = vmatpush1.msra.mxu0 %v434
    %436 = vmatprep.subr.mxu0 0.0
    %v437 = vand.u32 %v37, 4294901760
    %438 = vmatpush1.msra.mxu0 %v437
    %439 = vmatprep.subr.mxu0 0.0
    %v440 = vand.u32 %v36, 4294901760
    %441 = vmatpush1.msra.mxu0 %v440
    %442 = vmatprep.subr.mxu0 0.0
    %v443 = vand.u32 %v35, 4294901760
    %444 = vmatpush1.msra.mxu0 %v443
    %445 = vmatprep.subr.mxu0 0.0
    %v446 = vand.u32 %v34, 4294901760
    %447 = vmatpush1.msra.mxu0 %v446
    %448 = vmatprep.subr.mxu0 0.0
    %449 = vmatpush2.msra.mxu0 0.0
    %450 = vmatprep.subr.mxu0 0.0
    %451 = vmatpush2.msra.mxu0 0.0
    %452 = vmatprep.subr.mxu0 0.0
    %453 = vmatpush2.msra.mxu0 0.0
    %454 = vmatprep.subr.mxu0 0.0
    %455 = vmatpush2.msra.mxu0 0.0
    %456 = vmatprep.subr.mxu0 0.0
    %457 = vmatpush2.msra.mxu0 0.0
    %458 = vmatprep.subr.mxu0 0.0
    %459 = vmatpush2.msra.mxu0 0.0
    %460 = vmatprep.subr.mxu0 0.0
    %461 = vmatpush2.msra.mxu0 0.0
    %462 = vmatprep.subr.mxu0 0.0
    %463 = vmatpush2.msra.mxu0 0.0
    %464 = vmatprep.subr.mxu0 0.0
    %465 = vmatpush2.msra.mxu0 0.0
    %466 = vmatprep.subr.mxu0 0.0
    %467 = vmatpush2.msra.mxu0 0.0
    %468 = vmatprep.subr.mxu0 0.0
    %469 = vmatpush2.msra.mxu0 0.0
    %470 = vmatprep.subr.mxu0 0.0
    %471 = vmatpush2.msra.mxu0 0.0
    %472 = vmatprep.subr.mxu0 0.0
    %473 = vmatpush2.msra.mxu0 0.0
    %474 = vmatprep.subr.mxu0 0.0
    %475 = vmatpush2.msra.mxu0 0.0
    %476 = vmatprep.subr.mxu0 0.0
    %477 = vmatpush2.msra.mxu0 0.0
    %478 = vmatprep.subr.mxu0 0.0
    %479 = vmatpush2.msra.mxu0 0.0
    %480 = vmatprep.mubr.f32.mxu0 0.0
    %v481 = vand.u32 %v49, 4294901760
    %v482 = vsub.f32 %v49, %v481
    %v483 = vand.u32 %v482, 4294901760
    %484 = vmatmul.mubr.f32.gmra.mxu0 %v483
    %v485 = vpop.f32.mrf.mxu0
    %v486 = vadd.f32 %v393, %v485
    %v487 = vpop.f32.mrf.mxu0
    %488 = vmatprep.mubr.f32.mxu0 0.0
    %v489 = vand.u32 %v52, 4294901760
    %v490 = vsub.f32 %v52, %v489
    %v491 = vand.u32 %v490, 4294901760
    %492 = vmatmul.mubr.f32.gmra.mxu0 %v491
    %v493 = vpop.f32.mrf.mxu0
    %v494 = vadd.f32 %v400, %v493
    %v495 = vpop.f32.mrf.mxu0
    %496 = vdwg.mxu0
    %497 = vmatprep.subr.mxu0 0.0
    %498 = vmatpush1.msra.mxu0 0.0
    %499 = vmatprep.subr.mxu0 0.0
    %500 = vmatpush1.msra.mxu0 0.0
    %501 = vmatprep.subr.mxu0 0.0
    %502 = vmatpush1.msra.mxu0 0.0
    %503 = vmatprep.subr.mxu0 0.0
    %v504 = vand.u32 %v56, 4294901760
    %v505 = vsub.f32 %v56, %v504
    %v506 = vand.u32 %v505, 4294901760
    %507 = vmatpush1.msra.mxu0 %v506
    %508 = vmatprep.subr.mxu0 0.0
    %v509 = vand.u32 %v45, 4294901760
    %v510 = vsub.f32 %v45, %v509
    %v511 = vand.u32 %v510, 4294901760
    %512 = vmatpush1.msra.mxu0 %v511
    %513 = vmatprep.subr.mxu0 0.0
    %v514 = vand.u32 %v44, 4294901760
    %v515 = vsub.f32 %v44, %v514
    %v516 = vand.u32 %v515, 4294901760
    %517 = vmatpush1.msra.mxu0 %v516
    %518 = vmatprep.subr.mxu0 0.0
    %v519 = vand.u32 %v43, 4294901760
    %v520 = vsub.f32 %v43, %v519
    %v521 = vand.u32 %v520, 4294901760
    %522 = vmatpush1.msra.mxu0 %v521
    %523 = vmatprep.subr.mxu0 0.0
    %v524 = vand.u32 %v42, 4294901760
    %v525 = vsub.f32 %v42, %v524
    %v526 = vand.u32 %v525, 4294901760
    %527 = vmatpush1.msra.mxu0 %v526
    %528 = vmatprep.subr.mxu0 0.0
    %v529 = vand.u32 %v41, 4294901760
    %v530 = vsub.f32 %v41, %v529
    %v531 = vand.u32 %v530, 4294901760
    %532 = vmatpush1.msra.mxu0 %v531
    %533 = vmatprep.subr.mxu0 0.0
    %v534 = vand.u32 %v40, 4294901760
    %v535 = vsub.f32 %v40, %v534
    %v536 = vand.u32 %v535, 4294901760
    %537 = vmatpush1.msra.mxu0 %v536
    %538 = vmatprep.subr.mxu0 0.0
    %v539 = vand.u32 %v39, 4294901760
    %v540 = vsub.f32 %v39, %v539
    %v541 = vand.u32 %v540, 4294901760
    %542 = vmatpush1.msra.mxu0 %v541
    %543 = vmatprep.subr.mxu0 0.0
    %v544 = vand.u32 %v38, 4294901760
    %v545 = vsub.f32 %v38, %v544
    %v546 = vand.u32 %v545, 4294901760
    %547 = vmatpush1.msra.mxu0 %v546
    %548 = vmatprep.subr.mxu0 0.0
    %v549 = vand.u32 %v37, 4294901760
    %v550 = vsub.f32 %v37, %v549
    %v551 = vand.u32 %v550, 4294901760
    %552 = vmatpush1.msra.mxu0 %v551
    %553 = vmatprep.subr.mxu0 0.0
    %v554 = vand.u32 %v36, 4294901760
    %v555 = vsub.f32 %v36, %v554
    %v556 = vand.u32 %v555, 4294901760
    %557 = vmatpush1.msra.mxu0 %v556
    %558 = vmatprep.subr.mxu0 0.0
    %v559 = vand.u32 %v35, 4294901760
    %v560 = vsub.f32 %v35, %v559
    %v561 = vand.u32 %v560, 4294901760
    %562 = vmatpush1.msra.mxu0 %v561
    %563 = vmatprep.subr.mxu0 0.0
    %v564 = vand.u32 %v34, 4294901760
    %v565 = vsub.f32 %v34, %v564
    %v566 = vand.u32 %v565, 4294901760
    %567 = vmatpush1.msra.mxu0 %v566
    %568 = vmatprep.subr.mxu0 0.0
    %569 = vmatpush2.msra.mxu0 0.0
    %570 = vmatprep.subr.mxu0 0.0
    %571 = vmatpush2.msra.mxu0 0.0
    %572 = vmatprep.subr.mxu0 0.0
    %573 = vmatpush2.msra.mxu0 0.0
    %574 = vmatprep.subr.mxu0 0.0
    %575 = vmatpush2.msra.mxu0 0.0
    %576 = vmatprep.subr.mxu0 0.0
    %577 = vmatpush2.msra.mxu0 0.0
    %578 = vmatprep.subr.mxu0 0.0
    %579 = vmatpush2.msra.mxu0 0.0
    %580 = vmatprep.subr.mxu0 0.0
    %581 = vmatpush2.msra.mxu0 0.0
    %582 = vmatprep.subr.mxu0 0.0
    %583 = vmatpush2.msra.mxu0 0.0
    %584 = vmatprep.subr.mxu0 0.0
    %585 = vmatpush2.msra.mxu0 0.0
    %586 = vmatprep.subr.mxu0 0.0
    %587 = vmatpush2.msra.mxu0 0.0
    %588 = vmatprep.subr.mxu0 0.0
    %589 = vmatpush2.msra.mxu0 0.0
    %590 = vmatprep.subr.mxu0 0.0
    %591 = vmatpush2.msra.mxu0 0.0
    %592 = vmatprep.subr.mxu0 0.0
    %593 = vmatpush2.msra.mxu0 0.0
    %594 = vmatprep.subr.mxu0 0.0
    %595 = vmatpush2.msra.mxu0 0.0
    %596 = vmatprep.subr.mxu0 0.0
    %597 = vmatpush2.msra.mxu0 0.0
    %598 = vmatprep.subr.mxu0 0.0
    %599 = vmatpush2.msra.mxu0 0.0
    %600 = vmatprep.mubr.f32.mxu0 0.0
    %v601 = vand.u32 %v49, 4294901760
    %602 = vmatmul.mubr.f32.gmra.mxu0 %v601
    %v603 = vpop.f32.mrf.mxu0
    %v604 = vadd.f32 %v486, %v603
    %v605 = vpop.f32.mrf.mxu0
    %606 = vmatprep.mubr.f32.mxu0 0.0
    %v607 = vand.u32 %v52, 4294901760
    %608 = vmatmul.mubr.f32.gmra.mxu0 %v607
    %v609 = vpop.f32.mrf.mxu0
    %v610 = vadd.f32 %v494, %v609
    %v611 = vpop.f32.mrf.mxu0
    %612 = vdwg.mxu0
    %613 = vmatprep.subr.mxu0 0.0
    %614 = vmatpush1.msra.mxu0 0.0
    %615 = vmatprep.subr.mxu0 0.0
    %616 = vmatpush1.msra.mxu0 0.0
    %617 = vmatprep.subr.mxu0 0.0
    %618 = vmatpush1.msra.mxu0 0.0
    %619 = vmatprep.subr.mxu0 0.0
    %v620 = vand.u32 %v56, 4294901760
    %621 = vmatpush1.msra.mxu0 %v620
    %622 = vmatprep.subr.mxu0 0.0
    %v623 = vand.u32 %v45, 4294901760
    %624 = vmatpush1.msra.mxu0 %v623
    %625 = vmatprep.subr.mxu0 0.0
    %v626 = vand.u32 %v44, 4294901760
    %627 = vmatpush1.msra.mxu0 %v626
    %628 = vmatprep.subr.mxu0 0.0
    %v629 = vand.u32 %v43, 4294901760
    %630 = vmatpush1.msra.mxu0 %v629
    %631 = vmatprep.subr.mxu0 0.0
    %v632 = vand.u32 %v42, 4294901760
    %633 = vmatpush1.msra.mxu0 %v632
    %634 = vmatprep.subr.mxu0 0.0
    %v635 = vand.u32 %v41, 4294901760
    %636 = vmatpush1.msra.mxu0 %v635
    %637 = vmatprep.subr.mxu0 0.0
    %v638 = vand.u32 %v40, 4294901760
    %639 = vmatpush1.msra.mxu0 %v638
    %640 = vmatprep.subr.mxu0 0.0
    %v641 = vand.u32 %v39, 4294901760
    %642 = vmatpush1.msra.mxu0 %v641
    %643 = vmatprep.subr.mxu0 0.0
    %v644 = vand.u32 %v38, 4294901760
    %645 = vmatpush1.msra.mxu0 %v644
    %646 = vmatprep.subr.mxu0 0.0
    %v647 = vand.u32 %v37, 4294901760
    %648 = vmatpush1.msra.mxu0 %v647
    %649 = vmatprep.subr.mxu0 0.0
    %v650 = vand.u32 %v36, 4294901760
    %651 = vmatpush1.msra.mxu0 %v650
    %652 = vmatprep.subr.mxu0 0.0
    %v653 = vand.u32 %v35, 4294901760
    %654 = vmatpush1.msra.mxu0 %v653
    %655 = vmatprep.subr.mxu0 0.0
    %v656 = vand.u32 %v34, 4294901760
    %657 = vmatpush1.msra.mxu0 %v656
    %658 = vmatprep.subr.mxu0 0.0
    %659 = vmatpush2.msra.mxu0 0.0
    %660 = vmatprep.subr.mxu0 0.0
    %661 = vmatpush2.msra.mxu0 0.0
    %662 = vmatprep.subr.mxu0 0.0
    %663 = vmatpush2.msra.mxu0 0.0
    %664 = vmatprep.subr.mxu0 0.0
    %665 = vmatpush2.msra.mxu0 0.0
    %666 = vmatprep.subr.mxu0 0.0
    %667 = vmatpush2.msra.mxu0 0.0
    %668 = vmatprep.subr.mxu0 0.0
    %669 = vmatpush2.msra.mxu0 0.0
    %670 = vmatprep.subr.mxu0 0.0
    %671 = vmatpush2.msra.mxu0 0.0
    %672 = vmatprep.subr.mxu0 0.0
    %673 = vmatpush2.msra.mxu0 0.0
    %674 = vmatprep.subr.mxu0 0.0
    %675 = vmatpush2.msra.mxu0 0.0
    %676 = vmatprep.subr.mxu0 0.0
    %677 = vmatpush2.msra.mxu0 0.0
    %678 = vmatprep.subr.mxu0 0.0
    %679 = vmatpush2.msra.mxu0 0.0
    %680 = vmatprep.subr.mxu0 0.0
    %681 = vmatpush2.msra.mxu0 0.0
    %682 = vmatprep.subr.mxu0 0.0
    %683 = vmatpush2.msra.mxu0 0.0
    %684 = vmatprep.subr.mxu0 0.0
    %685 = vmatpush2.msra.mxu0 0.0
    %686 = vmatprep.subr.mxu0 0.0
    %687 = vmatpush2.msra.mxu0 0.0
    %688 = vmatprep.subr.mxu0 0.0
    %689 = vmatpush2.msra.mxu0 0.0
    %690 = vmatprep.mubr.f32.mxu0 0.0
    %v691 = vand.u32 %v49, 4294901760
    %692 = vmatmul.mubr.f32.gmra.mxu0 %v691
    %v693 = vpop.f32.mrf.mxu0
    %v694 = vadd.f32 %v604, %v693
    %v695 = vpop.f32.mrf.mxu0
    %696 = vmatprep.mubr.f32.mxu0 0.0
    %v697 = vand.u32 %v52, 4294901760
    %698 = vmatmul.mubr.f32.gmra.mxu0 %v697
    %v699 = vpop.f32.mrf.mxu0
    %v700 = vadd.f32 %v610, %v699
    %v701 = vpop.f32.mrf.mxu0
    %702 = vdwg.mxu0
    %v703 = vld [vmem:[%s3] sm:$0x1]
    %v704 = vld [vmem:[%s3 + $0x1] sm:$0x1]
    %v705 = vld [vmem:[%s1] sm:$0xff]
    %v706 = vld [vmem:[%s1 + $0x8] sm:$0xff]
    %vm707 = vcmp.ne.s32.totalorder %v705, 0
    %vm708 = vcmp.ne.s32.totalorder %v706, 0
    %v709 = vsel %vm707, 1, 0
    %v710 = vsel %vm708, 1, 0
    %711 = vset.pattern.permute.xlu0 0
    %712 = vperm.xlu0 %711, %v709
    %v713 = vpop.permute.xlu0 %712
    %714 = vset.pattern.permute.xlu0 0
    %715 = vperm.xlu0 %714, %v710
    %v716 = vpop.permute.xlu0 %715
    %vm717 = vcmp.eq.s32.totalorder %v713, 1
    %vm718 = vcmp.eq.s32.totalorder %v716, 1
    %v719 = vlaneseq
    %v720 = vshrl.u32 %v719, 7
    %v721 = vsub.s32 0, %v720
    %v722 = vrot.slane %v704, %v721
    %v723 = vlaneseq
    %v724 = vshrl.u32 %v723, 7
    %v725 = vsub.s32 0, %v724
    %v726 = vrot.slane %v703, %v725
    %v727 = vsel %vm717, %v722, %v726
    %v728 = vsel %vm718, %v722, %v726
    %731 = vrot.lane.b32.xlu0 %v727, 32
    %v732 = vpop.permute.xlu0 %731
    %733 = vrot.lane.b32.xlu0 %v728, 32
    %v734 = vpop.permute.xlu0 %733
    %vm737 = vcmask 261120
    %v738 = vsel %vm737, %v694, %v732
    %v739 = vsel %vm737, %v700, %v734
    %vm740 = vcmask 392192
    %741 = vst.msk [vmem:[#allocation2] sm:$0xff] %vm740, %v738
    %742 = vst.msk [vmem:[#allocation2 + $0x8] sm:$0xff] %vm740, %v739
    // Predicated region
    $region18: #{tpu_custom_call.1} parent=1 // pred_check
      _
    $region19: #{tpu_custom_call.1} parent=1 // pred_check_branch
      %744 = sbr.rel (0) target = $region21
    $region20: #{tpu_custom_call.1} parent=1 // pred_region
      %s746 = ssub.s32 256, 256
      %747 = vsyncadd [#allocation3], %s746
      %s748 = sshll.u32 [#allocation2], 4
      %s749 = int_to_ptr.vmem [resolvable:$true] %s748
      %754 = dma.vmem_to_hbm [thread:$0]  %s749, 256, %s4, [#allocation3], 128, 128, 8
    $region21: #{tpu_custom_call.1} parent=1 // pred_fallthru
      _
    // Predicated region
    $region22: #{tpu_custom_call.1} parent=1 // pred_check
      _
    $region23: #{tpu_custom_call.1} parent=1 // pred_check_branch
      %756 = sbr.rel (0) target = $region25
    $region24: #{tpu_custom_call.1} parent=1 // pred_region
      %757 = dma.done [#allocation3], 256
    $region25: #{tpu_custom_call.1} parent=1 // pred_fallthru
      _
    %758 = vsyncpa [#allocation3], 1

</llo_original>
